<compile_context>
chip_gen: v5e
topology: v5e:2x2
jax: 0.10.0
libtpu: 0.0.40
codegen_flags: <defaults>
</compile_context>

<pallas_src>
import jax
import jax.numpy as jnp
from jax.experimental import pallas as pl
from jax.experimental.pallas import tpu as pltpu


def _copy_kernel(x_ref, o_ref):
    # Straight VMEM copy of the current tile.
    o_ref[...] = x_ref[...]


# Native sublane tile per dtype width (sub-32-bit dtypes pack along sublanes).
_SUBLANE_FOR_ITEMSIZE = {4: 8, 2: 16, 1: 32}
# ~2 MiB per tile buffer: 2 input + 2 output double-buffers ~= 8 MiB live.
_TILE_BYTES_TARGET = 2 << 20


def _resolve_dims(dims, total):
    """PyTorch-style -1 resolution with validation."""
    dims = list(dims)
    neg = [i for i, d in enumerate(dims) if d == -1]
    if len(neg) > 1:
        raise ValueError("only one dimension can be -1")
    if neg:
        known = 1
        for d in dims:
            if d != -1:
                known *= d
        if known == 0 or total % known != 0:
            raise ValueError(f"cannot reshape array of size {total} into {tuple(dims)}")
        dims[neg[0]] = total // known
    dims = tuple(int(d) for d in dims)
    prod = 1
    for d in dims:
        prod *= d
    if prod != total:
        raise ValueError(f"cannot reshape array of size {total} into {dims}")
    return dims


def _pallas_identity_copy(flat: jax.Array) -> jax.Array:
    """Identity copy of a 1-D array through a tiled, lane-dense Pallas kernel."""
    total = flat.size
    itemsize = jnp.dtype(flat.dtype).itemsize
    sub = _SUBLANE_FOR_ITEMSIZE.get(itemsize, 8)

    # Lane width: widest multiple of 128 that still leaves at least one native
    # row-tile of real data (wider slabs -> unmasked full-width vst and fewer,
    # larger contiguous DMA descriptors per step).
    C = 128
    for cand in (2048, 1024, 512, 256):
        if total >= cand * sub:
            C = cand
            break

    # Tile rows: dtype-aware multiple of the native sublane tile, sized for the
    # ~2 MiB/buffer target, capped to the (rounded-up) amount of real data.
    rows_needed = pl.cdiv(total, C)
    tr = max(sub, (_TILE_BYTES_TARGET // (C * itemsize)) // sub * sub)
    tr = min(tr, pl.cdiv(rows_needed, sub) * sub)

    R = pl.cdiv(rows_needed, tr) * tr          # rows, padded to a multiple of tr
    padded_total = R * C

    if padded_total != total:
        flat = jnp.pad(flat, (0, padded_total - total))
    flat2d = flat.reshape(R, C)

    out2d = pl.pallas_call(
        _copy_kernel,
        out_shape=jax.ShapeDtypeStruct((R, C), flat2d.dtype),
        grid=(R // tr,),
        in_specs=[pl.BlockSpec((tr, C), lambda i: (i, 0))],
        out_specs=pl.BlockSpec((tr, C), lambda i: (i, 0)),
        # Alias input -> output: no new HBM buffer is allocated for the copy.
        input_output_aliases={0: 0},
        compiler_params=pltpu.CompilerParams(
            # Single row-tile axis, safe to shard across v7x's 2 TensorCores.
            dimension_semantics=("parallel",),
        ),
    )(flat2d)

    out1d = out2d.reshape(padded_total)
    if padded_total != total:
        out1d = out1d[:total]
    return out1d


def reshape_pallas(x: jax.Array, dims) -> jax.Array:
    """Equivalent of `Reshape(dims).forward(x)`.

    Note: for contiguous data `jnp.reshape(x, dims)` alone is a metadata-only
    (zero-traffic) op and is the fastest possible implementation; the Pallas
    kernel here performs the identity copy of the buffer (the memory-bound
    part) while the shape change itself remains free JAX glue.
    """
    total = x.size
    dims = _resolve_dims(dims, total)
    if total == 0:
        return jnp.reshape(x, dims)
    out_flat = _pallas_identity_copy(x.reshape(total))
    return out_flat.reshape(dims)


if __name__ == "__main__":
    key = jax.random.PRNGKey(0)

    # Case 1: small NCHW-like input, f32, lane-aligned total.
    x = jax.random.normal(key, (2, 4, 16, 16), dtype=jnp.float32)
    dims = (2, -1, 16)  # -> (2, 64, 16)
    out = reshape_pallas(x, dims)
    jax.block_until_ready(out)
    ref = jnp.reshape(x, (2, 64, 16))
    assert out.shape == ref.shape, (out.shape, ref.shape)
    assert out.dtype == ref.dtype
    assert bool(jnp.array_equal(out, ref))

    # Case 2: non-(8,128)-aligned total with a packed dtype (exercises the
    # padding path and the bf16 sublane tile).
    x2 = jax.random.normal(jax.random.PRNGKey(0), (3, 5, 7), dtype=jnp.bfloat16)
    out2 = reshape_pallas(x2, (-1,))
    jax.block_until_ready(out2)
    ref2 = jnp.reshape(x2, (105,))
    assert out2.shape == ref2.shape and out2.dtype == ref2.dtype
    assert bool(jnp.array_equal(out2, ref2))

    print("KERNEL_OK")
</pallas_src>

<mosaic_0001>
module attributes {stable_mosaic.version = 11 : i64} {
  func.func @_copy_kernel(%arg0: i32, %arg1: memref<8x256xf32, #tpu.memory_space<vmem>>, %arg2: memref<8x256xf32, #tpu.memory_space<vmem>>) attributes {dimension_semantics = [#tpu.dimension_semantics<parallel>], iteration_bounds = array<i64: 1>, scalar_prefetch = 0 : i64, scratch_operands = 0 : i64, tpu.core_type = #tpu.core_type<tc>, window_params = [{transform_indices = @transform_0, window_bounds = array<i64: 8, 256>}, {transform_indices = @transform_1, window_bounds = array<i64: 8, 256>}]} {
    %c0 = arith.constant 0 : index
    %c0_0 = arith.constant 0 : index
    %0 = vector.load %arg1[%c0, %c0_0] : memref<8x256xf32, #tpu.memory_space<vmem>>, vector<8x256xf32>
    %c0_1 = arith.constant 0 : index
    %c0_2 = arith.constant 0 : index
    %1 = vector.load %arg2[%c0_1, %c0_2] : memref<8x256xf32, #tpu.memory_space<vmem>>, vector<8x256xf32>
    tpu.vector_store %arg2[%c0_1, %c0_2], %0 {strides = array<i32>} : memref<8x256xf32, #tpu.memory_space<vmem>>, vector<8x256xf32>,
    return
  }
  func.func @transform_0(%arg0: i32) -> (i32, i32) {
    %c0_i32 = arith.constant 0 : i32
    %c0_i32_0 = arith.constant 0 : i32
    return %arg0, %c0_i32 : i32, i32
  }
  func.func @transform_1(%arg0: i32) -> (i32, i32) {
    %c0_i32 = arith.constant 0 : i32
    %c0_i32_0 = arith.constant 0 : i32
    return %arg0, %c0_i32 : i32, i32
  }
}

</mosaic_0001>

<llo_original>
// kernel: tpu_custom_call.1
$region0: #{tpu_custom_call.1}
  #allocation0 [shape = 'u32[]', space=smem, size = 0x4, offset = 0x4, fixed_abs, tag = 'smem constant byte address 0x4 - core index']
  #allocation1 [shape = 'u32[72,128]{1,0:T(1,128)}', space=vmem, size = 0x9000, scoped, tag = 'internal scratch']
  %s0 = inlined_call_operand.hbm [shape: f32[8,256], index: 0, kind: input, shape index: {}, may-alias: {0,1}]
  %s1 = inlined_call_operand.hbm [shape: f32[8,256], index: 1, kind: output, shape index: {}, may-alias: {0,1}]
  %s2 = sld [smem:[#allocation0]]
  $region18: #{tpu_custom_call.1} parent=0
    _
  %s4 = ssub.s32 1, %s2
  %s5 = scalar_select 0, %s4, %s2
  $region1: #{tpu_custom_call.1} parent=0
    #allocation2 [shape = 'u8[8192]{0}', space=vmem, size = 0x2000, scoped, tag = 'input window, operand 0, single buffered']
    #allocation3 [shape = 's32[1]{0}', space=sflag, size = 0x4, scoped, tag = 'scoped memory for tpu_custom_call.1']
    #allocation4 [shape = 's32[1]{0}', space=sflag, size = 0x4, scoped, tag = 'scoped memory for tpu_custom_call.1']
    #allocation5 [shape = 'u8[8192]{0}', space=vmem, size = 0x2000, scoped, tag = 'output window, operand 0, single buffered']
    %6 = vsyncpa [#allocation3], 0
    %7 = vsyncpa [#allocation4], 0
    // Predicated region
    $region2: #{tpu_custom_call.1} parent=1 // pred_check
      _
    $region3: #{tpu_custom_call.1} parent=1 // pred_check_branch
      %9 = sbr.rel (0) target = $region5
    $region4: #{tpu_custom_call.1} parent=1 // pred_region
      %11 = vsyncadd [#allocation3], 0
      %s13 = sshll.u32 %s0, 4
      %s14 = int_to_ptr.hbm [resolvable:$true] %s13
      %s15 = sshll.u32 [#allocation2], 4
      %s16 = int_to_ptr.vmem [resolvable:$true] %s15
      %18 = dma.hbm_to_vmem [thread:$0]  %s14, 256, %s16, [#allocation3]
    $region5: #{tpu_custom_call.1} parent=1 // pred_fallthru
      _
    // Predicated region
    $region6: #{tpu_custom_call.1} parent=1 // pred_check
      _
    $region7: #{tpu_custom_call.1} parent=1 // pred_check_branch
      %20 = sbr.rel (0) target = $region9
    $region8: #{tpu_custom_call.1} parent=1 // pred_region
      %22 = dma.done [#allocation3], 256
    $region9: #{tpu_custom_call.1} parent=1 // pred_fallthru
      _
    %v23 = vld [vmem:[#allocation2] sm:$0xff]
    %v24 = vld [vmem:[#allocation2 + $0x8] sm:$0xff]
    %25 = vst [vmem:[#allocation5] sm:$0xff] %v23
    %26 = vst [vmem:[#allocation5 + $0x8] sm:$0xff] %v24
    // Predicated region
    $region10: #{tpu_custom_call.1} parent=1 // pred_check
      _
    $region11: #{tpu_custom_call.1} parent=1 // pred_check_branch
      %28 = sbr.rel (0) target = $region13
    $region12: #{tpu_custom_call.1} parent=1 // pred_region
      %30 = vsyncadd [#allocation4], 0
      %s32 = sshll.u32 [#allocation5], 4
      %s33 = int_to_ptr.vmem [resolvable:$true] %s32
      %s34 = sshll.u32 %s1, 4
      %s35 = int_to_ptr.hbm [resolvable:$true] %s34
      %37 = dma.vmem_to_hbm [thread:$0]  %s33, 256, %s35, [#allocation4]
    $region13: #{tpu_custom_call.1} parent=1 // pred_fallthru
      _
    // Predicated region
    $region14: #{tpu_custom_call.1} parent=1 // pred_check
      _
    $region15: #{tpu_custom_call.1} parent=1 // pred_check_branch
      %39 = sbr.rel (0) target = $region17
    $region16: #{tpu_custom_call.1} parent=1 // pred_region
      %41 = dma.done [#allocation4], 256
    $region17: #{tpu_custom_call.1} parent=1 // pred_fallthru
      _
    %42 = vsyncpa [#allocation3], 1
    %43 = vsyncpa [#allocation4], 1

</llo_original>
